<compile_context>
chip_gen: v6e
topology: v6e:2x2x1
jax: 0.10.0
libtpu: 0.0.40
codegen_flags: <defaults>
</compile_context>

<pallas_src>
import functools

import jax
import jax.numpy as jnp
from jax.experimental import pallas as pl
from jax.experimental.pallas import tpu as pltpu


def _cdiv(a, b):
    return (a + b - 1) // b


def _round_up(a, m):
    return _cdiv(a, m) * m


def _act_dtype_for_device():
    """bf16 activations on chips with a native bf16 VPU (v6e / v7x), else f32."""
    try:
        kind = jax.devices()[0].device_kind.lower()
    except Exception:
        return jnp.float32
    if any(tag in kind for tag in ("v6", "v7", "7x")):
        return jnp.bfloat16
    return jnp.float32


def conv3d_kernel(x_ref, w1_ref, b1_ref, w2_ref, b2_ref, w3_ref, b3_ref,
                  feat_ref, *, act_dtype):
    tb, s, f3 = x_ref.shape
    m = tb * s

    # Boundary masks for the flattened M = TB*S axis (sequence fastest), built
    # once at full 128-lane width and reused by layers 2 and 3.  They zero the
    # t-1 / t+1 neighbour where it is sequence zero-padding or belongs to a
    # different batch element.
    pos = jax.lax.broadcasted_iota(jnp.int32, (m, 128), 0) % s
    keep_prev = pos != 0
    keep_next = pos != (s - 1)

    # ---- layer 1: taps pre-gathered in the wrapper (im2col), f32 matmul ----
    x_cat = x_ref[...].reshape(m, f3)                                   # (M, 3F)
    y1 = jnp.dot(x_cat, w1_ref[...], preferred_element_type=jnp.float32)
    h1 = jnp.maximum(y1 + b1_ref[...], 0.0).astype(act_dtype)           # (M, 128)

    # ---- layer 2: K-fused taps (Cin=128 -> lane-aligned concat) ------------
    prev1 = jnp.where(keep_prev, pltpu.roll(h1, 1, axis=0), 0.0)        # h1[t-1]
    nxt1 = jnp.where(keep_next, pltpu.roll(h1, m - 1, axis=0), 0.0)     # h1[t+1]
    cat2 = jnp.concatenate(
        [prev1.astype(jnp.bfloat16), h1.astype(jnp.bfloat16),
         nxt1.astype(jnp.bfloat16)], axis=-1)                           # (M, 384)
    y2 = jnp.dot(cat2, w2_ref[...], preferred_element_type=jnp.float32)
    h2 = jnp.maximum(y2 + b2_ref[...], 0.0).astype(jnp.bfloat16)        # (M, 64)

    # ---- layer 3: N-fused taps, 128-lane-padded output slabs ---------------
    z = jnp.dot(h2, w3_ref[...], preferred_element_type=jnp.float32)    # (M, 384)
    z_prev = jnp.where(keep_prev, pltpu.roll(z[:, 0:128], 1, axis=0), 0.0)
    z_next = jnp.where(keep_next, pltpu.roll(z[:, 256:384], m - 1, axis=0), 0.0)
    h3 = jnp.maximum(z_prev + z[:, 128:256] + z_next + b3_ref[...], 0.0)

    # MaxPool3d(kernel=(S,1,1)) == max over the sequence axis.  Lane-dense
    # (TB, 128) output slab; columns 32.. are exactly zero by construction.
    feat_ref[...] = jnp.max(h3.reshape(tb, s, 128), axis=1)


def conv3d_forward(x, params, *, act_dtype=None):
    """x: (B, S, F) float32. Returns (logits (B, 2), feature (B, 32))."""
    B, S, F = x.shape
    w1, b1, w2, b2, w3, b3, wfc, bfc = params
    if act_dtype is None:
        act_dtype = _act_dtype_for_device()

    # ---- weight layout prep (would be done once in a real model) -----------
    # Layer 1: K-fused taps, rows ordered [tap t-1 | t | t+1]; f32 (K=12 is free).
    w1c = w1.reshape(3 * F, 128).astype(jnp.float32)
    # Layer 2: K-fused taps, bf16 MXU operand.
    w2c = w2.reshape(3 * 128, 64).astype(jnp.bfloat16)
    # Layer 3: N-fused taps, each 32-wide tap zero-padded into a 128-lane slab
    # so the kernel's output-slab slices (and the final feature writeback) are
    # lane-aligned / lane-dense.
    w3p = jnp.zeros((64, 3 * 128), jnp.float32)
    w3p = (w3p.at[:, 0:32].set(w3[0])
               .at[:, 128:160].set(w3[1])
               .at[:, 256:288].set(w3[2])).astype(jnp.bfloat16)
    b3p = jnp.zeros((1, 128), jnp.float32).at[:, 0:32].set(b3)

    # ---- batch tiling: M = TB*S ~ 2048 rows per grid step -------------------
    target_m = 2048
    tb = max(8, _round_up(_cdiv(target_m, S), 8))
    tb = min(tb, _round_up(B, 8))
    # Keep >= 2 grid steps when the batch allows it so the "parallel" batch
    # axis can shard across both TensorCores on v7x (neutral on v5e/v6e).
    if _round_up(B, tb) == tb and _round_up(B, 8) >= 16:
        tb = _round_up(_cdiv(_round_up(B, 8), 2), 8)
    b_pad = _round_up(B, tb)
    x_p = jnp.pad(x, ((0, b_pad - B), (0, 0), (0, 0))) if b_pad != B else x

    # ---- layer-1 tap gather (im2col) in XLA: (B, S, F) -> (B, S, 3F) --------
    zero_tap = jnp.zeros((b_pad, 1, F), x_p.dtype)
    x_cat = jnp.concatenate(
        [jnp.concatenate([zero_tap, x_p[:, :-1]], axis=1),    # x[t-1]
         x_p,                                                 # x[t]
         jnp.concatenate([x_p[:, 1:], zero_tap], axis=1)],    # x[t+1]
        axis=-1)

    grid = (b_pad // tb,)

    def resident_spec(a):
        zeros = (0,) * a.ndim
        return pl.BlockSpec(a.shape, lambda b, _z=zeros: _z)

    m_total = b_pad * S
    flops = 2 * m_total * (3 * F * 128 + 3 * 128 * 64 + 64 * 3 * 128)
    bytes_accessed = (x_cat.size * 4 + w1c.size * 4 + w2c.size * 2
                      + w3p.size * 2 + (b1.size + b2.size) * 4
                      + b3p.size * 4 + b_pad * 128 * 4)

    def _call_kernel(adt):
        return pl.pallas_call(
            functools.partial(conv3d_kernel, act_dtype=adt),
            out_shape=jax.ShapeDtypeStruct((b_pad, 128), jnp.float32),
            grid=grid,
            in_specs=[
                pl.BlockSpec((tb, S, 3 * F), lambda b: (b, 0, 0)),
                resident_spec(w1c), resident_spec(b1),
                resident_spec(w2c), resident_spec(b2),
                resident_spec(w3p), resident_spec(b3p),
            ],
            out_specs=pl.BlockSpec((tb, 128), lambda b: (b, 0)),
            compiler_params=pltpu.CompilerParams(
                dimension_semantics=("parallel",),
                vmem_limit_bytes=32 * 1024 * 1024),
            cost_estimate=pl.CostEstimate(
                flops=flops, transcendentals=0,
                bytes_accessed=bytes_accessed),
        )(x_cat, w1c, b1, w2c, b2, w3p, b3p)

    if act_dtype == jnp.bfloat16:
        try:
            feat = _call_kernel(jnp.bfloat16)
        except Exception:
            # Safety net: if this Mosaic build rejects packed-bf16 sublane
            # rolls, fall back to the f32-activation (v5e-style) path.
            feat = _call_kernel(jnp.float32)
    else:
        feat = _call_kernel(jnp.float32)

    feat = feat[:B, :32]
    # fc1 (32 -> 2) is tiny; run it in XLA so the kernel only writes the
    # lane-dense feature slab.  Dropout is identity in eval mode.
    logits = jnp.dot(feat, wfc) + bfc
    return logits, feat


def _reference_forward(x, params):
    """Pure-JAX f32 reference mirroring the PyTorch forward (eval mode)."""
    w1, b1, w2, b2, w3, b3, wfc, bfc = params

    def conv(h, w, b):
        zero = jnp.zeros((h.shape[0], 1, h.shape[2]), h.dtype)
        prev = jnp.concatenate([zero, h[:, :-1]], axis=1)
        nxt = jnp.concatenate([h[:, 1:], zero], axis=1)
        y = (jnp.einsum("bsc,cd->bsd", prev, w[0])
             + jnp.einsum("bsc,cd->bsd", h, w[1])
             + jnp.einsum("bsc,cd->bsd", nxt, w[2])) + b[None]
        return jnp.maximum(y, 0.0)

    h = conv(x, w1, b1)
    h = conv(h, w2, b2)
    h = conv(h, w3, b3)
    feat = jnp.max(h, axis=1)
    logits = jnp.dot(feat, wfc) + bfc
    return logits, feat


def init_params(key, feature_dim_app):
    """Deterministic PyTorch-style (kaiming-uniform-ish) init."""
    def conv_init(k, cin, cout):
        k_w, k_b = jax.random.split(k)
        bound = 1.0 / jnp.sqrt(cin * 3.0)
        w = jax.random.uniform(k_w, (3, cin, cout), jnp.float32, -bound, bound)
        b = jax.random.uniform(k_b, (1, cout), jnp.float32, -bound, bound)
        return w, b

    def fc_init(k, cin, cout):
        k_w, k_b = jax.random.split(k)
        bound = 1.0 / jnp.sqrt(float(cin))
        w = jax.random.uniform(k_w, (cin, cout), jnp.float32, -bound, bound)
        b = jax.random.uniform(k_b, (1, cout), jnp.float32, -bound, bound)
        return w, b

    k1, k2, k3, k4 = jax.random.split(key, 4)
    w1, b1 = conv_init(k1, feature_dim_app, 128)
    w2, b2 = conv_init(k2, 128, 64)
    w3, b3 = conv_init(k3, 64, 32)
    wfc, bfc = fc_init(k4, 32, 2)
    return (w1, b1, w2, b2, w3, b3, wfc, bfc)


if __name__ == "__main__":
    key = jax.random.PRNGKey(0)
    k_x, k_p, k_x2 = jax.random.split(key, 3)

    batch, seq_len, feat_dim = 2, 8, 4
    x = jax.random.normal(k_x, (batch, seq_len, feat_dim), jnp.float32)
    params = init_params(k_p, feat_dim)

    logits, feature = conv3d_forward(x, params)
    jax.block_until_ready((logits, feature))
    assert logits.shape == (batch, 2) and feature.shape == (batch, 32)

    def _max_err(a, b):
        return float(jnp.max(jnp.abs(a - b)))

    def _check(out, ref, name):
        tol = 2e-2 + 2e-2 * float(jnp.max(jnp.abs(ref)))
        err = _max_err(out, ref)
        assert err <= tol, (name + " mismatch", err, tol)

    # Numerical self-check against a pure-JAX f32 reference (bf16 MXU operands
    # in the kernel -> loose-ish tolerance, still tight enough to catch any
    # shift / tap-ordering / slab-layout mistake).
    ref_logits, ref_feature = _reference_forward(x, params)
    _check(feature, ref_feature, "feature")
    _check(logits, ref_logits, "logits")

    # Second check with a batch that exercises multi-step grids, batch padding
    # and the cross-tile boundary masking of the flattened M axis.
    batch2 = 20
    x2 = jax.random.normal(k_x2, (batch2, seq_len, feat_dim), jnp.float32)
    logits2, feature2 = conv3d_forward(x2, params)
    jax.block_until_ready((logits2, feature2))
    ref_logits2, ref_feature2 = _reference_forward(x2, params)
    _check(feature2, ref_feature2, "feature(batch=20)")
    _check(logits2, ref_logits2, "logits(batch=20)")

    print("KERNEL_OK")
</pallas_src>

<mosaic_0001>
module attributes {stable_mosaic.version = 11 : i64} {
  func.func @conv3d_kernel(%arg0: i32, %arg1: memref<8x8x12xf32, #tpu.memory_space<vmem>>, %arg2: memref<12x128xf32, #tpu.memory_space<vmem>>, %arg3: memref<1x128xf32, #tpu.memory_space<vmem>>, %arg4: memref<384x64xbf16, #tpu.memory_space<vmem>>, %arg5: memref<1x64xf32, #tpu.memory_space<vmem>>, %arg6: memref<64x384xbf16, #tpu.memory_space<vmem>>, %arg7: memref<1x128xf32, #tpu.memory_space<vmem>>, %arg8: memref<8x128xf32, #tpu.memory_space<vmem>>) attributes {dimension_semantics = [#tpu.dimension_semantics<parallel>], iteration_bounds = array<i64: 1>, scalar_prefetch = 0 : i64, scratch_operands = 0 : i64, tpu.core_type = #tpu.core_type<tc>, window_params = [{transform_indices = @transform_0, window_bounds = array<i64: 8, 8, 12>}, {pipeline_mode = #tpu.pipeline_mode<synchronous>, transform_indices = @transform_1, window_bounds = array<i64: 12, 128>}, {pipeline_mode = #tpu.pipeline_mode<synchronous>, transform_indices = @transform_2, window_bounds = array<i64: 1, 128>}, {pipeline_mode = #tpu.pipeline_mode<synchronous>, transform_indices = @transform_3, window_bounds = array<i64: 384, 64>}, {pipeline_mode = #tpu.pipeline_mode<synchronous>, transform_indices = @transform_4, window_bounds = array<i64: 1, 64>}, {pipeline_mode = #tpu.pipeline_mode<synchronous>, transform_indices = @transform_5, window_bounds = array<i64: 64, 384>}, {pipeline_mode = #tpu.pipeline_mode<synchronous>, transform_indices = @transform_6, window_bounds = array<i64: 1, 128>}, {transform_indices = @transform_7, window_bounds = array<i64: 8, 128>}]} {
    %0 = tpu.iota {dimensions = array<i32: 0>} : vector<64x128xi32>
    %c8_i32 = arith.constant 8 : i32
    %c0_i32 = arith.constant 0 : i32
    %1 = arith.cmpi eq, %c8_i32, %c0_i32 : i32
    %c1_i32 = arith.constant 1 : i32
    %2 = arith.select %1, %c1_i32, %c8_i32 : i32
    %3 = vector.broadcast %2 : i32 to vector<64x128xi32>
    %4 = arith.remsi %0, %3 : vector<64x128xi32>
    %c0_i32_0 = arith.constant 0 : i32
    %5 = vector.broadcast %c0_i32_0 : i32 to vector<64x128xi32>
    %6 = arith.cmpi ne, %4, %5 : vector<64x128xi32>
    %c0_i32_1 = arith.constant 0 : i32
    %7 = vector.broadcast %c0_i32_1 : i32 to vector<64x128xi32>
    %8 = arith.cmpi slt, %4, %7 : vector<64x128xi32>
    %c0_i32_2 = arith.constant 0 : i32
    %9 = arith.cmpi slt, %2, %c0_i32_2 : i32
    %10 = vector.broadcast %9 : i1 to vector<64x128xi1>
    %11 = vector.broadcast %10 : vector<64x128xi1> to vector<64x128xi1>
    %12 = arith.xori %8, %11 : vector<64x128xi1>
    %13 = arith.andi %12, %6 : vector<64x128xi1>
    %14 = vector.broadcast %2 : i32 to vector<64x128xi32>
    %15 = arith.addi %4, %14 : vector<64x128xi32>
    %16 = arith.select %13, %15, %4 : vector<64x128xi1>, vector<64x128xi32>
    %c0_i32_3 = arith.constant 0 : i32
    %17 = vector.broadcast %c0_i32_3 : i32 to vector<64x128xi32>
    %18 = arith.cmpi ne, %16, %17 : vector<64x128xi32>
    %c7_i32 = arith.constant 7 : i32
    %19 = vector.broadcast %c7_i32 : i32 to vector<64x128xi32>
    %20 = arith.cmpi ne, %16, %19 : vector<64x128xi32>
    %c0 = arith.constant 0 : index
    %c0_4 = arith.constant 0 : index
    %c0_5 = arith.constant 0 : index
    %21 = vector.load %arg1[%c0, %c0_4, %c0_5] : memref<8x8x12xf32, #tpu.memory_space<vmem>>, vector<8x8x12xf32>
    %22 = vector.shape_cast %21 : vector<8x8x12xf32> to vector<64x12xf32>
    %c0_6 = arith.constant 0 : index
    %c0_7 = arith.constant 0 : index
    %23 = vector.load %arg2[%c0_6, %c0_7] : memref<12x128xf32, #tpu.memory_space<vmem>>, vector<12x128xf32>
    %cst = arith.constant dense<0.000000e+00> : vector<64x128xf32>
    %24 = tpu.matmul %22, %23, %cst {dimension_numbers = #tpu.dot_dimension_numbers<[1], [0], [0], [1], [0, 0, 1, 1], [], []>} : vector<64x12xf32>, vector<12x128xf32>, vector<64x128xf32> -> vector<64x128xf32>
    %c0_8 = arith.constant 0 : index
    %c0_9 = arith.constant 0 : index
    %25 = vector.load %arg3[%c0_8, %c0_9] : memref<1x128xf32, #tpu.memory_space<vmem>>, vector<1x128xf32>
    %26 = vector.broadcast %25 : vector<1x128xf32> to vector<64x128xf32>
    %27 = arith.addf %24, %26 : vector<64x128xf32>
    %cst_10 = arith.constant 0.000000e+00 : f32
    %28 = vector.broadcast %cst_10 : f32 to vector<64x128xf32>
    %29 = arith.maximumf %27, %28 : vector<64x128xf32>
    %c1_i32_11 = arith.constant 1 : i32
    %30 = tpu.dynamic_rotate %29 by %c1_i32_11 dim 0 : vector<64x128xf32>, i32 -> vector<64x128xf32>
    %cst_12 = arith.constant 0.000000e+00 : f32
    %31 = vector.broadcast %cst_12 : f32 to vector<64x128xf32>
    %32 = arith.select %18, %30, %31 : vector<64x128xi1>, vector<64x128xf32>
    %c63_i32 = arith.constant 63 : i32
    %33 = tpu.dynamic_rotate %29 by %c63_i32 dim 0 : vector<64x128xf32>, i32 -> vector<64x128xf32>
    %cst_13 = arith.constant 0.000000e+00 : f32
    %34 = vector.broadcast %cst_13 : f32 to vector<64x128xf32>
    %35 = arith.select %20, %33, %34 : vector<64x128xi1>, vector<64x128xf32>
    %36 = arith.truncf %32 : vector<64x128xf32> to vector<64x128xbf16>
    %37 = arith.truncf %29 : vector<64x128xf32> to vector<64x128xbf16>
    %38 = arith.truncf %35 : vector<64x128xf32> to vector<64x128xbf16>
    %39 = tpu.concatenate %36, %37, %38 in 1 : vector<64x128xbf16>, vector<64x128xbf16>, vector<64x128xbf16> -> vector<64x384xbf16>
    %c0_14 = arith.constant 0 : index
    %c0_15 = arith.constant 0 : index
    %40 = vector.load %arg4[%c0_14, %c0_15] : memref<384x64xbf16, #tpu.memory_space<vmem>>, vector<384x64xbf16>
    %cst_16 = arith.constant dense<0.000000e+00> : vector<64x64xf32>
    %41 = tpu.matmul %39, %40, %cst_16 {dimension_numbers = #tpu.dot_dimension_numbers<[1], [0], [0], [1], [0, 0, 1, 1], [], []>} : vector<64x384xbf16>, vector<384x64xbf16>, vector<64x64xf32> -> vector<64x64xf32>
    %c0_17 = arith.constant 0 : index
    %c0_18 = arith.constant 0 : index
    %42 = vector.load %arg5[%c0_17, %c0_18] : memref<1x64xf32, #tpu.memory_space<vmem>>, vector<1x64xf32>
    %43 = vector.broadcast %42 : vector<1x64xf32> to vector<64x64xf32>
    %44 = arith.addf %41, %43 : vector<64x64xf32>
    %cst_19 = arith.constant 0.000000e+00 : f32
    %45 = vector.broadcast %cst_19 : f32 to vector<64x64xf32>
    %46 = arith.maximumf %44, %45 : vector<64x64xf32>
    %47 = arith.truncf %46 : vector<64x64xf32> to vector<64x64xbf16>
    %c0_20 = arith.constant 0 : index
    %c0_21 = arith.constant 0 : index
    %48 = vector.load %arg6[%c0_20, %c0_21] : memref<64x384xbf16, #tpu.memory_space<vmem>>, vector<64x384xbf16>
    %cst_22 = arith.constant dense<0.000000e+00> : vector<64x384xf32>
    %49 = tpu.matmul %47, %48, %cst_22 {dimension_numbers = #tpu.dot_dimension_numbers<[1], [0], [0], [1], [0, 0, 1, 1], [], []>} : vector<64x64xbf16>, vector<64x384xbf16>, vector<64x384xf32> -> vector<64x384xf32>
    %50 = vector.extract_strided_slice %49 {offsets = [0, 0], sizes = [64, 128], strides = [1, 1]} : vector<64x384xf32> to vector<64x128xf32>
    %c1_i32_23 = arith.constant 1 : i32
    %51 = tpu.dynamic_rotate %50 by %c1_i32_23 dim 0 : vector<64x128xf32>, i32 -> vector<64x128xf32>
    %cst_24 = arith.constant 0.000000e+00 : f32
    %52 = vector.broadcast %cst_24 : f32 to vector<64x128xf32>
    %53 = arith.select %18, %51, %52 : vector<64x128xi1>, vector<64x128xf32>
    %54 = vector.extract_strided_slice %49 {offsets = [0, 256], sizes = [64, 128], strides = [1, 1]} : vector<64x384xf32> to vector<64x128xf32>
    %c63_i32_25 = arith.constant 63 : i32
    %55 = tpu.dynamic_rotate %54 by %c63_i32_25 dim 0 : vector<64x128xf32>, i32 -> vector<64x128xf32>
    %cst_26 = arith.constant 0.000000e+00 : f32
    %56 = vector.broadcast %cst_26 : f32 to vector<64x128xf32>
    %57 = arith.select %20, %55, %56 : vector<64x128xi1>, vector<64x128xf32>
    %58 = vector.extract_strided_slice %49 {offsets = [0, 128], sizes = [64, 128], strides = [1, 1]} : vector<64x384xf32> to vector<64x128xf32>
    %59 = arith.addf %53, %58 : vector<64x128xf32>
    %60 = arith.addf %59, %57 : vector<64x128xf32>
    %c0_27 = arith.constant 0 : index
    %c0_28 = arith.constant 0 : index
    %61 = vector.load %arg7[%c0_27, %c0_28] : memref<1x128xf32, #tpu.memory_space<vmem>>, vector<1x128xf32>
    %62 = vector.broadcast %61 : vector<1x128xf32> to vector<64x128xf32>
    %63 = arith.addf %60, %62 : vector<64x128xf32>
    %cst_29 = arith.constant 0.000000e+00 : f32
    %64 = vector.broadcast %cst_29 : f32 to vector<64x128xf32>
    %65 = arith.maximumf %63, %64 : vector<64x128xf32>
    %66 = vector.shape_cast %65 : vector<64x128xf32> to vector<8x8x128xf32>
    %cst_30 = arith.constant dense<0xFF800000> : vector<8x128xf32>
    %67 = vector.multi_reduction <maximumf>, %66, %cst_30 [1] : vector<8x8x128xf32> to vector<8x128xf32>
    %c0_31 = arith.constant 0 : index
    %c0_32 = arith.constant 0 : index
    %68 = vector.load %arg8[%c0_31, %c0_32] : memref<8x128xf32, #tpu.memory_space<vmem>>, vector<8x128xf32>
    tpu.vector_store %arg8[%c0_31, %c0_32], %67 {strides = array<i32>} : memref<8x128xf32, #tpu.memory_space<vmem>>, vector<8x128xf32>,
    return
  }
  func.func @transform_0(%arg0: i32) -> (i32, i32, i32) {
    %c0_i32 = arith.constant 0 : i32
    %c0_i32_0 = arith.constant 0 : i32
    %c0_i32_1 = arith.constant 0 : i32
    return %arg0, %c0_i32, %c0_i32_0 : i32, i32, i32
  }
  func.func @transform_1(%arg0: i32) -> (i32, i32) {
    %c0_i32 = arith.constant 0 : i32
    %c0_i32_0 = arith.constant 0 : i32
    %c0_i32_1 = arith.constant 0 : i32
    return %c0_i32, %c0_i32_0 : i32, i32
  }
  func.func @transform_2(%arg0: i32) -> (i32, i32) {
    %c0_i32 = arith.constant 0 : i32
    %c0_i32_0 = arith.constant 0 : i32
    %c0_i32_1 = arith.constant 0 : i32
    return %c0_i32, %c0_i32_0 : i32, i32
  }
  func.func @transform_3(%arg0: i32) -> (i32, i32) {
    %c0_i32 = arith.constant 0 : i32
    %c0_i32_0 = arith.constant 0 : i32
    %c0_i32_1 = arith.constant 0 : i32
    return %c0_i32, %c0_i32_0 : i32, i32
  }
  func.func @transform_4(%arg0: i32) -> (i32, i32) {
    %c0_i32 = arith.constant 0 : i32
    %c0_i32_0 = arith.constant 0 : i32
    %c0_i32_1 = arith.constant 0 : i32
    return %c0_i32, %c0_i32_0 : i32, i32
  }
  func.func @transform_5(%arg0: i32) -> (i32, i32) {
    %c0_i32 = arith.constant 0 : i32
    %c0_i32_0 = arith.constant 0 : i32
    %c0_i32_1 = arith.constant 0 : i32
    return %c0_i32, %c0_i32_0 : i32, i32
  }
  func.func @transform_6(%arg0: i32) -> (i32, i32) {
    %c0_i32 = arith.constant 0 : i32
    %c0_i32_0 = arith.constant 0 : i32
    %c0_i32_1 = arith.constant 0 : i32
    return %c0_i32, %c0_i32_0 : i32, i32
  }
  func.func @transform_7(%arg0: i32) -> (i32, i32) {
    %c0_i32 = arith.constant 0 : i32
    %c0_i32_0 = arith.constant 0 : i32
    return %arg0, %c0_i32 : i32, i32
  }
}

</mosaic_0001>

<llo_original>
// kernel: tpu_custom_call.1
$region0: #{tpu_custom_call.1}
  #allocation0 [shape = 'u32[]', space=smem, size = 0x4, offset = 0x4, fixed_abs, tag = 'smem constant byte address 0x4 - core index']
  #allocation1 [shape = 'u32[144,128]{1,0:T(1,128)}', space=vmem, size = 0x12000, scoped, tag = 'internal scratch']
  %s0 = inlined_call_operand.vmem [shape: f32[8,8,12], index: 0, kind: input, shape index: {}]
  %s1 = inlined_call_operand.vmem [shape: f32[12,128], index: 1, kind: input, shape index: {}]
  %s2 = inlined_call_operand.vmem [shape: f32[1,128], index: 2, kind: input, shape index: {}]
  %s3 = inlined_call_operand.vmem [shape: bf16[384,64], index: 3, kind: input, shape index: {}]
  %s4 = inlined_call_operand.vmem [shape: f32[1,64], index: 4, kind: input, shape index: {}]
  %s5 = inlined_call_operand.vmem [shape: bf16[64,384], index: 5, kind: input, shape index: {}]
  %s6 = inlined_call_operand.vmem [shape: f32[1,128], index: 6, kind: input, shape index: {}]
  %s7 = inlined_call_operand.hbm [shape: f32[8,128], index: 7, kind: output, shape index: {}]
  %s8 = sld [smem:[#allocation0]]
  $region38: #{tpu_custom_call.1} parent=0
    _
  %s10 = ssub.s32 1, %s8
  %s11 = scalar_select 0, %s10, %s8
  $region1: #{tpu_custom_call.1} parent=0
    #allocation2 [shape = 'u8[4096]{0}', space=vmem, size = 0x1000, scoped, tag = 'output window, operand 0, single buffered']
    #allocation3 [shape = 's32[1]{0}', space=sflag, size = 0x4, scoped, tag = 'scoped memory for tpu_custom_call.1']
    %12 = vsyncpa [#allocation3], 0
    // Predicated region
    $region2: #{tpu_custom_call.1} parent=1 // pred_check
      _
    $region3: #{tpu_custom_call.1} parent=1 // pred_check_branch
      %14 = sbr.rel (0) target = $region5
    $region4: #{tpu_custom_call.1} parent=1 // pred_region
      _
    $region5: #{tpu_custom_call.1} parent=1 // pred_fallthru
      _
    // Predicated region
    $region6: #{tpu_custom_call.1} parent=1 // pred_check
      _
    $region7: #{tpu_custom_call.1} parent=1 // pred_check_branch
      %16 = sbr.rel (0) target = $region9
    $region8: #{tpu_custom_call.1} parent=1 // pred_region
      _
    $region9: #{tpu_custom_call.1} parent=1 // pred_fallthru
      _
    // Predicated region
    $region10: #{tpu_custom_call.1} parent=1 // pred_check
      _
    $region11: #{tpu_custom_call.1} parent=1 // pred_check_branch
      %18 = sbr.rel (0) target = $region13
    $region12: #{tpu_custom_call.1} parent=1 // pred_region
      _
    $region13: #{tpu_custom_call.1} parent=1 // pred_fallthru
      _
    // Predicated region
    $region14: #{tpu_custom_call.1} parent=1 // pred_check
      _
    $region15: #{tpu_custom_call.1} parent=1 // pred_check_branch
      %20 = sbr.rel (0) target = $region17
    $region16: #{tpu_custom_call.1} parent=1 // pred_region
      _
    $region17: #{tpu_custom_call.1} parent=1 // pred_fallthru
      _
    // Predicated region
    $region18: #{tpu_custom_call.1} parent=1 // pred_check
      _
    $region19: #{tpu_custom_call.1} parent=1 // pred_check_branch
      %22 = sbr.rel (0) target = $region21
    $region20: #{tpu_custom_call.1} parent=1 // pred_region
      _
    $region21: #{tpu_custom_call.1} parent=1 // pred_fallthru
      _
    // Predicated region
    $region22: #{tpu_custom_call.1} parent=1 // pred_check
      _
    $region23: #{tpu_custom_call.1} parent=1 // pred_check_branch
      %24 = sbr.rel (0) target = $region25
    $region24: #{tpu_custom_call.1} parent=1 // pred_region
      _
    $region25: #{tpu_custom_call.1} parent=1 // pred_fallthru
      _
    // Predicated region
    $region26: #{tpu_custom_call.1} parent=1 // pred_check
      _
    $region27: #{tpu_custom_call.1} parent=1 // pred_check_branch
      %26 = sbr.rel (0) target = $region29
    $region28: #{tpu_custom_call.1} parent=1 // pred_region
      _
    $region29: #{tpu_custom_call.1} parent=1 // pred_fallthru
      _
    %v28 = vlaneseq
    %v29 = vshrl.u32 %v28, 7
    %v30 = vadd.s32 %v29, 8
    %v31 = vadd.s32 %v29, 16
    %v32 = vadd.s32 %v29, 24
    %v33 = vadd.s32 %v29, 32
    %v34 = vadd.s32 %v29, 40
    %v35 = vadd.s32 %v29, 48
    %v36 = vadd.s32 %v29, 56
    %vm37 = vcmp.lt.s32.totalorder %v29, 0
    %v38 = vsub.s32 0, %v29
    %v39 = vsel %vm37, %v38, %v29
    %v40 = vshrl.u32 %v39, 3
    %v41 = vand.u32 %v39, 7
    %v42 = vsub.s32 0, %v41
    %v43 = vsel %vm37, %v42, %v41
    %vm44 = vcmp.lt.s32.totalorder %v30, 0
    %v45 = vsub.s32 0, %v30
    %v46 = vsel %vm44, %v45, %v30
    %v47 = vshrl.u32 %v46, 3
    %v48 = vand.u32 %v46, 7
    %v49 = vsub.s32 0, %v48
    %v50 = vsel %vm44, %v49, %v48
    %vm51 = vcmp.lt.s32.totalorder %v31, 0
    %v52 = vsub.s32 0, %v31
    %v53 = vsel %vm51, %v52, %v31
    %v54 = vshrl.u32 %v53, 3
    %v55 = vand.u32 %v53, 7
    %v56 = vsub.s32 0, %v55
    %v57 = vsel %vm51, %v56, %v55
    %vm58 = vcmp.lt.s32.totalorder %v32, 0
    %v59 = vsub.s32 0, %v32
    %v60 = vsel %vm58, %v59, %v32
    %v61 = vshrl.u32 %v60, 3
    %v62 = vand.u32 %v60, 7
    %v63 = vsub.s32 0, %v62
    %v64 = vsel %vm58, %v63, %v62
    %vm65 = vcmp.lt.s32.totalorder %v33, 0
    %v66 = vsub.s32 0, %v33
    %v67 = vsel %vm65, %v66, %v33
    %v68 = vshrl.u32 %v67, 3
    %v69 = vand.u32 %v67, 7
    %v70 = vsub.s32 0, %v69
    %v71 = vsel %vm65, %v70, %v69
    %vm72 = vcmp.lt.s32.totalorder %v34, 0
    %v73 = vsub.s32 0, %v34
    %v74 = vsel %vm72, %v73, %v34
    %v75 = vshrl.u32 %v74, 3
    %v76 = vand.u32 %v74, 7
    %v77 = vsub.s32 0, %v76
    %v78 = vsel %vm72, %v77, %v76
    %vm79 = vcmp.lt.s32.totalorder %v35, 0
    %v80 = vsub.s32 0, %v35
    %v81 = vsel %vm79, %v80, %v35
    %v82 = vshrl.u32 %v81, 3
    %v83 = vand.u32 %v81, 7
    %v84 = vsub.s32 0, %v83
    %v85 = vsel %vm79, %v84, %v83
    %vm86 = vcmp.lt.s32.totalorder %v36, 0
    %v87 = vsub.s32 0, %v36
    %v88 = vsel %vm86, %v87, %v36
    %v89 = vshrl.u32 %v88, 3
    %v90 = vand.u32 %v88, 7
    %v91 = vsub.s32 0, %v90
    %v92 = vsel %vm86, %v91, %v90
    %vm93 = vcmp.ne.s32.totalorder %v43, 0
    %vm94 = vcmp.ne.s32.totalorder %v50, 0
    %vm95 = vcmp.ne.s32.totalorder %v57, 0
    %vm96 = vcmp.ne.s32.totalorder %v64, 0
    %vm97 = vcmp.ne.s32.totalorder %v71, 0
    %vm98 = vcmp.ne.s32.totalorder %v78, 0
    %vm99 = vcmp.ne.s32.totalorder %v85, 0
    %vm100 = vcmp.ne.s32.totalorder %v92, 0
    %vm101 = vcmp.lt.s32.totalorder %v43, 0
    %vm102 = vcmp.lt.s32.totalorder %v50, 0
    %vm103 = vcmp.lt.s32.totalorder %v57, 0
    %vm104 = vcmp.lt.s32.totalorder %v64, 0
    %vm105 = vcmp.lt.s32.totalorder %v71, 0
    %vm106 = vcmp.lt.s32.totalorder %v78, 0
    %vm107 = vcmp.lt.s32.totalorder %v85, 0
    %vm108 = vcmp.lt.s32.totalorder %v92, 0
    %vm109 = vmand %vm101, %vm93
    %vm110 = vmand %vm102, %vm94
    %vm111 = vmand %vm103, %vm95
    %vm112 = vmand %vm104, %vm96
    %vm113 = vmand %vm105, %vm97
    %vm114 = vmand %vm106, %vm98
    %vm115 = vmand %vm107, %vm99
    %vm116 = vmand %vm108, %vm100
    %v117 = vadd.s32 %v43, 8
    %v118 = vadd.s32 %v50, 8
    %v119 = vadd.s32 %v57, 8
    %v120 = vadd.s32 %v64, 8
    %v121 = vadd.s32 %v71, 8
    %v122 = vadd.s32 %v78, 8
    %v123 = vadd.s32 %v85, 8
    %v124 = vadd.s32 %v92, 8
    %v125 = vsel %vm109, %v117, %v43
    %v126 = vsel %vm110, %v118, %v50
    %v127 = vsel %vm111, %v119, %v57
    %v128 = vsel %vm112, %v120, %v64
    %v129 = vsel %vm113, %v121, %v71
    %v130 = vsel %vm114, %v122, %v78
    %v131 = vsel %vm115, %v123, %v85
    %v132 = vsel %vm116, %v124, %v92
    %vm133 = vcmp.ne.s32.totalorder %v125, 0
    %vm134 = vcmp.ne.s32.totalorder %v126, 0
    %vm135 = vcmp.ne.s32.totalorder %v127, 0
    %vm136 = vcmp.ne.s32.totalorder %v128, 0
    %vm137 = vcmp.ne.s32.totalorder %v129, 0
    %vm138 = vcmp.ne.s32.totalorder %v130, 0
    %vm139 = vcmp.ne.s32.totalorder %v131, 0
    %vm140 = vcmp.ne.s32.totalorder %v132, 0
    %vm141 = vcmp.ne.s32.totalorder %v125, 7
    %vm142 = vcmp.ne.s32.totalorder %v126, 7
    %vm143 = vcmp.ne.s32.totalorder %v127, 7
    %vm144 = vcmp.ne.s32.totalorder %v128, 7
    %vm145 = vcmp.ne.s32.totalorder %v129, 7
    %vm146 = vcmp.ne.s32.totalorder %v130, 7
    %vm147 = vcmp.ne.s32.totalorder %v131, 7
    %vm148 = vcmp.ne.s32.totalorder %v132, 7
    %v149 = vld [vmem:[%s0] sm:$0xff]
    %v150 = vld [vmem:[%s0 + $0x8] sm:$0xff]
    %v151 = vld [vmem:[%s0 + $0x10] sm:$0xff]
    %v152 = vld [vmem:[%s0 + $0x18] sm:$0xff]
    %v153 = vld [vmem:[%s0 + $0x20] sm:$0xff]
    %v154 = vld [vmem:[%s0 + $0x28] sm:$0xff]
    %v155 = vld [vmem:[%s0 + $0x30] sm:$0xff]
    %v156 = vld [vmem:[%s0 + $0x38] sm:$0xff]
    %v157 = vld [vmem:[%s1] sm:$0xff]
    %v158 = vld [vmem:[%s1 + $0x8] sm:$0xf]
    %v159 = vld [vmem:[%s2] sm:$0x1]
    %v161 = vlaneseq
    %v162 = vshrl.u32 %v161, 7
    %v163 = vsub.s32 0, %v162
    %v164 = vrot.slane %v159, %v163
    %vm166 = vcmask 97280
    %v168 = vsel %vm166, %v149, 0
    %v171 = vsel %vm166, %v150, 0
    %v174 = vsel %vm166, %v151, 0
    %v177 = vsel %vm166, %v152, 0
    %v180 = vsel %vm166, %v153, 0
    %v183 = vsel %vm166, %v154, 0
    %v186 = vsel %vm166, %v155, 0
    %v189 = vsel %vm166, %v156, 0
    %vm191 = vcmask 1043456
    %v193 = vsel %vm191, %v158, 0
    %195 = vmatprep.subr.mxu0 0.0
    %196 = vmatpush1.msra.mxu0 0.0
    %197 = vmatprep.subr.mxu0 0.0
    %198 = vmatpush1.msra.mxu0 0.0
    %199 = vmatprep.subr.mxu0 0.0
    %200 = vmatpush1.msra.mxu0 0.0
    %201 = vmatprep.subr.mxu0 0.0
    %202 = vmatpush1.msra.mxu0 0.0
    %203 = vmatprep.subr.mxu0 0.0
    %204 = vmatpush1.msra.mxu0 0.0
    %205 = vmatprep.subr.mxu0 0.0
    %206 = vmatpush1.msra.mxu0 0.0
    %207 = vmatprep.subr.mxu0 0.0
    %208 = vmatpush1.msra.mxu0 0.0
    %209 = vmatprep.subr.mxu0 0.0
    %210 = vmatpush1.msra.mxu0 0.0
    %211 = vmatprep.subr.mxu0 0.0
    %212 = vmatpush1.msra.mxu0 0.0
    %213 = vmatprep.subr.mxu0 0.0
    %214 = vmatpush1.msra.mxu0 0.0
    %215 = vmatprep.subr.mxu0 0.0
    %216 = vmatpush1.msra.mxu0 0.0
    %217 = vmatprep.subr.mxu0 0.0
    %218 = vmatpush1.msra.mxu0 0.0
    %219 = vmatprep.subr.mxu0 0.0
    %220 = vmatpush1.msra.mxu0 0.0
    %221 = vmatprep.subr.mxu0 0.0
    %222 = vmatpush1.msra.mxu0 0.0
    %223 = vmatprep.subr.mxu0 0.0
    %224 = vmatpush1.msra.mxu0 %v193
    %225 = vmatprep.subr.mxu0 0.0
    %226 = vmatpush1.msra.mxu0 %v157
    %227 = vmatprep.subr.mxu0 0.0
    %228 = vmatpush2.msra.mxu0 0.0
    %229 = vmatprep.subr.mxu0 0.0
    %230 = vmatpush2.msra.mxu0 0.0
    %231 = vmatprep.subr.mxu0 0.0
    %232 = vmatpush2.msra.mxu0 0.0
    %233 = vmatprep.subr.mxu0 0.0
    %234 = vmatpush2.msra.mxu0 0.0
    %235 = vmatprep.subr.mxu0 0.0
    %236 = vmatpush2.msra.mxu0 0.0
    %237 = vmatprep.subr.mxu0 0.0
    %238 = vmatpush2.msra.mxu0 0.0
    %239 = vmatprep.subr.mxu0 0.0
    %240 = vmatpush2.msra.mxu0 0.0
    %241 = vmatprep.subr.mxu0 0.0
    %242 = vmatpush2.msra.mxu0 0.0
    %243 = vmatprep.subr.mxu0 0.0
    %244 = vmatpush2.msra.mxu0 0.0
    %245 = vmatprep.subr.mxu0 0.0
    %246 = vmatpush2.msra.mxu0 0.0
    %247 = vmatprep.subr.mxu0 0.0
    %248 = vmatpush2.msra.mxu0 0.0
    %249 = vmatprep.subr.mxu0 0.0
    %250 = vmatpush2.msra.mxu0 0.0
    %251 = vmatprep.subr.mxu0 0.0
    %252 = vmatpush2.msra.mxu0 0.0
    %253 = vmatprep.subr.mxu0 0.0
    %254 = vmatpush2.msra.mxu0 0.0
    %255 = vmatprep.subr.mxu0 0.0
    %256 = vmatpush2.msra.mxu0 0.0
    %257 = vmatprep.subr.mxu0 0.0
    %258 = vmatpush2.msra.mxu0 0.0
    %259 = vmatprep.mubr.f32.mxu0 0.0
    %260 = vmatmul.mubr.f32.gmra.mxu0 %v168
    %v261 = vpop.f32.mrf.mxu0
    %v262 = vadd.f32 %v164, %v261
    %v263 = vpop.f32.mrf.mxu0
    %264 = vmatprep.mubr.f32.mxu0 0.0
    %265 = vmatmul.mubr.f32.gmra.mxu0 %v171
    %v266 = vpop.f32.mrf.mxu0
    %v267 = vadd.f32 %v164, %v266
    %v268 = vpop.f32.mrf.mxu0
    %269 = vmatprep.mubr.f32.mxu0 0.0
    %270 = vmatmul.mubr.f32.gmra.mxu0 %v174
    %v271 = vpop.f32.mrf.mxu0
    %v272 = vadd.f32 %v164, %v271
    %v273 = vpop.f32.mrf.mxu0
    %274 = vmatprep.mubr.f32.mxu0 0.0
    %275 = vmatmul.mubr.f32.gmra.mxu0 %v177
    %v276 = vpop.f32.mrf.mxu0
    %v277 = vadd.f32 %v164, %v276
    %v278 = vpop.f32.mrf.mxu0
    %279 = vmatprep.mubr.f32.mxu0 0.0
    %280 = vmatmul.mubr.f32.gmra.mxu0 %v180
    %v281 = vpop.f32.mrf.mxu0
    %v282 = vadd.f32 %v164, %v281
    %v283 = vpop.f32.mrf.mxu0
    %284 = vmatprep.mubr.f32.mxu0 0.0
    %285 = vmatmul.mubr.f32.gmra.mxu0 %v183
    %v286 = vpop.f32.mrf.mxu0
    %v287 = vadd.f32 %v164, %v286
    %v288 = vpop.f32.mrf.mxu0
    %289 = vmatprep.mubr.f32.mxu0 0.0
    %290 = vmatmul.mubr.f32.gmra.mxu0 %v186
    %v291 = vpop.f32.mrf.mxu0
    %v292 = vadd.f32 %v164, %v291
    %v293 = vpop.f32.mrf.mxu0
    %294 = vmatprep.mubr.f32.mxu0 0.0
    %295 = vmatmul.mubr.f32.gmra.mxu0 %v189
    %v296 = vpop.f32.mrf.mxu0
    %v297 = vadd.f32 %v164, %v296
    %v298 = vpop.f32.mrf.mxu0
    %299 = vdwg.mxu0
    %v300 = vmax.f32 %v262, 0.0
    %v301 = vmax.f32 %v267, 0.0
    %v302 = vmax.f32 %v272, 0.0
    %v303 = vmax.f32 %v277, 0.0
    %v304 = vmax.f32 %v282, 0.0
    %v305 = vmax.f32 %v287, 0.0
    %v306 = vmax.f32 %v292, 0.0
    %v307 = vmax.f32 %v297, 0.0
    %v308 = vrot.slane %v300, 7
    %v309 = vrot.slane %v301, 7
    %v310 = vrot.slane %v302, 7
    %v311 = vrot.slane %v303, 7
    %v312 = vrot.slane %v304, 7
    %v313 = vrot.slane %v305, 7
    %v314 = vrot.slane %v306, 7
    %v315 = vrot.slane %v307, 7
    %vm316 = vcmp.lt.s32.totalorder %v29, 1
    %v317 = vsel %vm316, %v314, %v315
    %v318 = vsel %vm316, %v313, %v314
    %v319 = vsel %vm316, %v312, %v313
    %v320 = vsel %vm316, %v311, %v312
    %v321 = vsel %vm316, %v310, %v311
    %v322 = vsel %vm316, %v309, %v310
    %v323 = vsel %vm316, %v308, %v309
    %v324 = vsel %vm316, %v315, %v308
    %v325 = vsel %vm133, %v324, 0.0
    %v326 = vsel %vm134, %v323, 0.0
    %v327 = vsel %vm135, %v322, 0.0
    %v328 = vsel %vm136, %v321, 0.0
    %v329 = vsel %vm137, %v320, 0.0
    %v330 = vsel %vm138, %v319, 0.0
    %v331 = vsel %vm139, %v318, 0.0
    %v332 = vsel %vm140, %v317, 0.0
    %v333 = vrot.slane %v300, 1
    %v334 = vrot.slane %v301, 1
    %v335 = vrot.slane %v302, 1
    %v336 = vrot.slane %v303, 1
    %v337 = vrot.slane %v304, 1
    %v338 = vrot.slane %v305, 1
    %v339 = vrot.slane %v306, 1
    %v340 = vrot.slane %v307, 1
    %vm341 = vcmp.lt.s32.totalorder %v29, 7
    %v342 = vsel %vm341, %v339, %v340
    %v343 = vsel %vm341, %v338, %v339
    %v344 = vsel %vm341, %v337, %v338
    %v345 = vsel %vm341, %v336, %v337
    %v346 = vsel %vm341, %v335, %v336
    %v347 = vsel %vm341, %v334, %v335
    %v348 = vsel %vm341, %v333, %v334
    %v349 = vsel %vm341, %v340, %v333
    %v350 = vsel %vm141, %v348, 0.0
    %v351 = vsel %vm142, %v347, 0.0
    %v352 = vsel %vm143, %v346, 0.0
    %v353 = vsel %vm144, %v345, 0.0
    %v354 = vsel %vm145, %v344, 0.0
    %v355 = vsel %vm146, %v343, 0.0
    %v356 = vsel %vm147, %v342, 0.0
    %v357 = vsel %vm148, %v349, 0.0
    %v358 = vpack.c.bf16 %v326, %v325
    %v359 = vpack.c.bf16 %v328, %v327
    %v360 = vpack.c.bf16 %v330, %v329
    %v361 = vpack.c.bf16 %v332, %v331
    %v362 = vpack.c.bf16 %v301, %v300
    %v363 = vpack.c.bf16 %v303, %v302
    %v364 = vpack.c.bf16 %v305, %v304
    %v365 = vpack.c.bf16 %v307, %v306
    %v366 = vpack.c.bf16 %v351, %v350
    %v367 = vpack.c.bf16 %v353, %v352
    %v368 = vpack.c.bf16 %v355, %v354
    %v369 = vpack.c.bf16 %v357, %v356
    %v370 = vld [vmem:[%s3] sm:$0xf]
    %v371 = vld [vmem:[%s3 + $0x4] sm:$0xf]
    %v372 = vld [vmem:[%s3 + $0x8] sm:$0xf]
    %v373 = vld [vmem:[%s3 + $0xc] sm:$0xf]
    %v374 = vld [vmem:[%s3 + $0x10] sm:$0xf]
    %v375 = vld [vmem:[%s3 + $0x14] sm:$0xf]
    %v376 = vld [vmem:[%s3 + $0x18] sm:$0xf]
    %v377 = vld [vmem:[%s3 + $0x1c] sm:$0xf]
    %v378 = vld [vmem:[%s3 + $0x20] sm:$0xf]
    %v379 = vld [vmem:[%s3 + $0x24] sm:$0xf]
    %v380 = vld [vmem:[%s3 + $0x28] sm:$0xf]
    %v381 = vld [vmem:[%s3 + $0x2c] sm:$0xf]
    %v382 = vld [vmem:[%s3 + $0x30] sm:$0xf]
    %v383 = vld [vmem:[%s3 + $0x34] sm:$0xf]
    %v384 = vld [vmem:[%s3 + $0x38] sm:$0xf]
    %v385 = vld [vmem:[%s3 + $0x3c] sm:$0xf]
    %v386 = vld [vmem:[%s3 + $0x40] sm:$0xf]
    %v387 = vld [vmem:[%s3 + $0x44] sm:$0xf]
    %v388 = vld [vmem:[%s3 + $0x48] sm:$0xf]
    %v389 = vld [vmem:[%s3 + $0x4c] sm:$0xf]
    %v390 = vld [vmem:[%s3 + $0x50] sm:$0xf]
    %v391 = vld [vmem:[%s3 + $0x54] sm:$0xf]
    %v392 = vld [vmem:[%s3 + $0x58] sm:$0xf]
    %v393 = vld [vmem:[%s3 + $0x5c] sm:$0xf]
    %v394 = vld [vmem:[%s3 + $0x60] sm:$0xf]
    %v395 = vld [vmem:[%s3 + $0x64] sm:$0xf]
    %v396 = vld [vmem:[%s3 + $0x68] sm:$0xf]
    %v397 = vld [vmem:[%s3 + $0x6c] sm:$0xf]
    %v398 = vld [vmem:[%s3 + $0x70] sm:$0xf]
    %v399 = vld [vmem:[%s3 + $0x74] sm:$0xf]
    %v400 = vld [vmem:[%s3 + $0x78] sm:$0xf]
    %v401 = vld [vmem:[%s3 + $0x7c] sm:$0xf]
    %v402 = vld [vmem:[%s3 + $0x80] sm:$0xf]
    %v403 = vld [vmem:[%s3 + $0x84] sm:$0xf]
    %v404 = vld [vmem:[%s3 + $0x88] sm:$0xf]
    %v405 = vld [vmem:[%s3 + $0x8c] sm:$0xf]
    %v406 = vld [vmem:[%s3 + $0x90] sm:$0xf]
    %v407 = vld [vmem:[%s3 + $0x94] sm:$0xf]
    %v408 = vld [vmem:[%s3 + $0x98] sm:$0xf]
    %v409 = vld [vmem:[%s3 + $0x9c] sm:$0xf]
    %v410 = vld [vmem:[%s3 + $0xa0] sm:$0xf]
    %v411 = vld [vmem:[%s3 + $0xa4] sm:$0xf]
    %v412 = vld [vmem:[%s3 + $0xa8] sm:$0xf]
    %v413 = vld [vmem:[%s3 + $0xac] sm:$0xf]
    %v414 = vld [vmem:[%s3 + $0xb0] sm:$0xf]
    %v415 = vld [vmem:[%s3 + $0xb4] sm:$0xf]
    %v416 = vld [vmem:[%s3 + $0xb8] sm:$0xf]
    %v417 = vld [vmem:[%s3 + $0xbc] sm:$0xf]
    %v418 = vld [vmem:[%s4] sm:$0x1]
    %v420 = vlaneseq
    %v421 = vshrl.u32 %v420, 7
    %v422 = vsub.s32 0, %v421
    %v423 = vrot.slane %v418, %v422
    %v473 = vunpack.c.l.b16 %v370
    %v474 = vunpack.c.l.b16 %v371
    %v475 = vunpack.c.l.b16 %v372
    %v476 = vunpack.c.l.b16 %v373
    %v477 = vunpack.c.l.b16 %v374
    %v478 = vunpack.c.l.b16 %v375
    %v479 = vunpack.c.l.b16 %v376
    %v480 = vunpack.c.l.b16 %v377
    %v481 = vunpack.c.l.b16 %v378
    %v482 = vunpack.c.l.b16 %v379
    %v483 = vunpack.c.l.b16 %v380
    %v484 = vunpack.c.l.b16 %v381
    %v485 = vunpack.c.l.b16 %v382
    %v486 = vunpack.c.l.b16 %v383
    %v487 = vunpack.c.l.b16 %v384
    %v488 = vunpack.c.l.b16 %v385
    %v489 = vunpack.c.l.b16 %v386
    %v490 = vunpack.c.l.b16 %v387
    %v491 = vunpack.c.l.b16 %v388
    %v492 = vunpack.c.l.b16 %v389
    %v493 = vunpack.c.l.b16 %v390
    %v494 = vunpack.c.l.b16 %v391
    %v495 = vunpack.c.l.b16 %v392
    %v496 = vunpack.c.l.b16 %v393
    %v497 = vunpack.c.l.b16 %v394
    %v498 = vunpack.c.l.b16 %v395
    %v499 = vunpack.c.l.b16 %v396
    %v500 = vunpack.c.l.b16 %v397
    %v501 = vunpack.c.l.b16 %v398
    %v502 = vunpack.c.l.b16 %v399
    %v503 = vunpack.c.l.b16 %v400
    %v504 = vunpack.c.l.b16 %v401
    %v505 = vunpack.c.l.b16 %v402
    %v506 = vunpack.c.l.b16 %v403
    %v507 = vunpack.c.l.b16 %v404
    %v508 = vunpack.c.l.b16 %v405
    %v509 = vunpack.c.l.b16 %v406
    %v510 = vunpack.c.l.b16 %v407
    %v511 = vunpack.c.l.b16 %v408
    %v512 = vunpack.c.l.b16 %v409
    %v513 = vunpack.c.l.b16 %v410
    %v514 = vunpack.c.l.b16 %v411
    %v515 = vunpack.c.l.b16 %v412
    %v516 = vunpack.c.l.b16 %v413
    %v517 = vunpack.c.l.b16 %v414
    %v518 = vunpack.c.l.b16 %v415
    %v519 = vunpack.c.l.b16 %v416
    %v520 = vunpack.c.l.b16 %v417
    %v521 = vpack.c.b16 %v474, %v473
    %v522 = vpack.c.b16 %v476, %v475
    %v523 = vpack.c.b16 %v478, %v477
    %v524 = vpack.c.b16 %v480, %v479
    %v525 = vpack.c.b16 %v482, %v481
    %v526 = vpack.c.b16 %v484, %v483
    %v527 = vpack.c.b16 %v486, %v485
    %v528 = vpack.c.b16 %v488, %v487
    %v529 = vpack.c.b16 %v490, %v489
    %v530 = vpack.c.b16 %v492, %v491
    %v531 = vpack.c.b16 %v494, %v493
    %v532 = vpack.c.b16 %v496, %v495
    %v533 = vpack.c.b16 %v498, %v497
    %v534 = vpack.c.b16 %v500, %v499
    %v535 = vpack.c.b16 %v502, %v501
    %v536 = vpack.c.b16 %v504, %v503
    %v537 = vpack.c.b16 %v506, %v505
    %v538 = vpack.c.b16 %v508, %v507
    %v539 = vpack.c.b16 %v510, %v509
    %v540 = vpack.c.b16 %v512, %v511
    %v541 = vpack.c.b16 %v514, %v513
    %v542 = vpack.c.b16 %v516, %v515
    %v543 = vpack.c.b16 %v518, %v517
    %v544 = vpack.c.b16 %v520, %v519
    %569 = vmatprep.subr.bf16.mxu0 0
    %570 = vmatpush1.bf16.msra.mxu0 %v528
    %571 = vmatprep.subr.bf16.mxu0 0
    %572 = vmatpush1.bf16.msra.mxu0 %v527
    %573 = vmatprep.subr.bf16.mxu0 0
    %574 = vmatpush1.bf16.msra.mxu0 %v526
    %575 = vmatprep.subr.bf16.mxu0 0
    %576 = vmatpush1.bf16.msra.mxu0 %v525
    %577 = vmatprep.subr.bf16.mxu0 0
    %578 = vmatpush1.bf16.msra.mxu0 %v524
    %579 = vmatprep.subr.bf16.mxu0 0
    %580 = vmatpush1.bf16.msra.mxu0 %v523
    %581 = vmatprep.subr.bf16.mxu0 0
    %582 = vmatpush1.bf16.msra.mxu0 %v522
    %583 = vmatprep.subr.bf16.mxu0 0
    %584 = vmatpush1.bf16.msra.mxu0 %v521
    %585 = vmatprep.subr.bf16.mxu0 0
    %586 = vmatpush2.bf16.msra.mxu0 %v536
    %587 = vmatprep.subr.bf16.mxu0 0
    %588 = vmatpush2.bf16.msra.mxu0 %v535
    %589 = vmatprep.subr.bf16.mxu0 0
    %590 = vmatpush2.bf16.msra.mxu0 %v534
    %591 = vmatprep.subr.bf16.mxu0 0
    %592 = vmatpush2.bf16.msra.mxu0 %v533
    %593 = vmatprep.subr.bf16.mxu0 0
    %594 = vmatpush2.bf16.msra.mxu0 %v532
    %595 = vmatprep.subr.bf16.mxu0 0
    %596 = vmatpush2.bf16.msra.mxu0 %v531
    %597 = vmatprep.subr.bf16.mxu0 0
    %598 = vmatpush2.bf16.msra.mxu0 %v530
    %599 = vmatprep.subr.bf16.mxu0 0
    %600 = vmatpush2.bf16.msra.mxu0 %v529
    %601 = vmatprep.mubr.bf16.mxu0 %v362
    %602 = vmatmul.mubr.bf16.gmra.mxu0 %v358
    %v603 = vpop.f32.mrf.mxu0
    %v604 = vadd.f32 %v423, %v603
    %v605 = vpop.f32.mrf.mxu0
    %v606 = vpop.f32.mrf.mxu0
    %v607 = vadd.f32 %v423, %v606
    %v608 = vpop.f32.mrf.mxu0
    %609 = vmatprep.mubr.bf16.mxu0 %v363
    %610 = vmatmul.mubr.bf16.gmra.mxu0 %v359
    %v611 = vpop.f32.mrf.mxu0
    %v612 = vadd.f32 %v423, %v611
    %v613 = vpop.f32.mrf.mxu0
    %v614 = vpop.f32.mrf.mxu0
    %v615 = vadd.f32 %v423, %v614
    %v616 = vpop.f32.mrf.mxu0
    %617 = vmatprep.mubr.bf16.mxu0 %v364
    %618 = vmatmul.mubr.bf16.gmra.mxu0 %v360
    %v619 = vpop.f32.mrf.mxu0
    %v620 = vadd.f32 %v423, %v619
    %v621 = vpop.f32.mrf.mxu0
    %v622 = vpop.f32.mrf.mxu0
    %v623 = vadd.f32 %v423, %v622
    %v624 = vpop.f32.mrf.mxu0
    %625 = vmatprep.mubr.bf16.mxu0 %v365
    %626 = vmatmul.mubr.bf16.gmra.mxu0 %v361
    %v627 = vpop.f32.mrf.mxu0
    %v628 = vadd.f32 %v423, %v627
    %v629 = vpop.f32.mrf.mxu0
    %v630 = vpop.f32.mrf.mxu0
    %v631 = vadd.f32 %v423, %v630
    %v632 = vpop.f32.mrf.mxu0
    %633 = vdwg.mxu0
    %634 = vmatprep.subr.bf16.mxu0 0
    %635 = vmatpush1.bf16.msra.mxu0 %v544
    %636 = vmatprep.subr.bf16.mxu0 0
    %637 = vmatpush1.bf16.msra.mxu0 %v543
    %638 = vmatprep.subr.bf16.mxu0 0
    %639 = vmatpush1.bf16.msra.mxu0 %v542
    %640 = vmatprep.subr.bf16.mxu0 0
    %641 = vmatpush1.bf16.msra.mxu0 %v541
    %642 = vmatprep.subr.bf16.mxu0 0
    %643 = vmatpush1.bf16.msra.mxu0 %v540
    %644 = vmatprep.subr.bf16.mxu0 0
    %645 = vmatpush1.bf16.msra.mxu0 %v539
    %646 = vmatprep.subr.bf16.mxu0 0
    %647 = vmatpush1.bf16.msra.mxu0 %v538
    %648 = vmatprep.subr.bf16.mxu0 0
    %649 = vmatpush1.bf16.msra.mxu0 %v537
    %650 = vmatprep.subr.bf16.mxu0 0
    %651 = vmatpush2.bf16.msra.mxu0 0
    %652 = vmatprep.subr.bf16.mxu0 0
    %653 = vmatpush2.bf16.msra.mxu0 0
    %654 = vmatprep.subr.bf16.mxu0 0
    %655 = vmatpush2.bf16.msra.mxu0 0
    %656 = vmatprep.subr.bf16.mxu0 0
    %657 = vmatpush2.bf16.msra.mxu0 0
    %658 = vmatprep.subr.bf16.mxu0 0
    %659 = vmatpush2.bf16.msra.mxu0 0
    %660 = vmatprep.subr.bf16.mxu0 0
    %661 = vmatpush2.bf16.msra.mxu0 0
    %662 = vmatprep.subr.bf16.mxu0 0
    %663 = vmatpush2.bf16.msra.mxu0 0
    %664 = vmatprep.subr.bf16.mxu0 0
    %665 = vmatpush2.bf16.msra.mxu0 0
    %666 = vmatprep.mubr.bf16.mxu0 0
    %667 = vmatmul.mubr.bf16.gmra.mxu0 %v366
    %v668 = vpop.f32.mrf.mxu0
    %v669 = vadd.f32 %v604, %v668
    %v670 = vpop.f32.mrf.mxu0
    %v671 = vpop.f32.mrf.mxu0
    %v672 = vadd.f32 %v607, %v671
    %v673 = vpop.f32.mrf.mxu0
    %674 = vmatprep.mubr.bf16.mxu0 0
    %675 = vmatmul.mubr.bf16.gmra.mxu0 %v367
    %v676 = vpop.f32.mrf.mxu0
    %v677 = vadd.f32 %v612, %v676
    %v678 = vpop.f32.mrf.mxu0
    %v679 = vpop.f32.mrf.mxu0
    %v680 = vadd.f32 %v615, %v679
    %v681 = vpop.f32.mrf.mxu0
    %682 = vmatprep.mubr.bf16.mxu0 0
    %683 = vmatmul.mubr.bf16.gmra.mxu0 %v368
    %v684 = vpop.f32.mrf.mxu0
    %v685 = vadd.f32 %v620, %v684
    %v686 = vpop.f32.mrf.mxu0
    %v687 = vpop.f32.mrf.mxu0
    %v688 = vadd.f32 %v623, %v687
    %v689 = vpop.f32.mrf.mxu0
    %690 = vmatprep.mubr.bf16.mxu0 0
    %691 = vmatmul.mubr.bf16.gmra.mxu0 %v369
    %v692 = vpop.f32.mrf.mxu0
    %v693 = vadd.f32 %v628, %v692
    %v694 = vpop.f32.mrf.mxu0
    %v695 = vpop.f32.mrf.mxu0
    %v696 = vadd.f32 %v631, %v695
    %v697 = vpop.f32.mrf.mxu0
    %698 = vdwg.mxu0
    %v699 = vmax.f32 %v669, 0.0
    %v700 = vmax.f32 %v672, 0.0
    %v701 = vmax.f32 %v677, 0.0
    %v702 = vmax.f32 %v680, 0.0
    %v703 = vmax.f32 %v685, 0.0
    %v704 = vmax.f32 %v688, 0.0
    %v705 = vmax.f32 %v693, 0.0
    %v706 = vmax.f32 %v696, 0.0
    %v707 = vpack.c.bf16 %v700, %v699
    %v708 = vpack.c.bf16 %v702, %v701
    %v709 = vpack.c.bf16 %v704, %v703
    %v710 = vpack.c.bf16 %v706, %v705
    %v711 = vld [vmem:[%s5] sm:$0xff]
    %v712 = vld [vmem:[%s5 + $0x8] sm:$0xf]
    %v713 = vld [vmem:[%s5 + $0xc] sm:$0xff]
    %v714 = vld [vmem:[%s5 + $0x14] sm:$0xf]
    %v715 = vld [vmem:[%s5 + $0x18] sm:$0xff]
    %v716 = vld [vmem:[%s5 + $0x20] sm:$0xf]
    %v717 = vld [vmem:[%s5 + $0x24] sm:$0xff]
    %v718 = vld [vmem:[%s5 + $0x2c] sm:$0xf]
    %v719 = vld [vmem:[%s5 + $0x30] sm:$0xff]
    %v720 = vld [vmem:[%s5 + $0x38] sm:$0xf]
    %v721 = vld [vmem:[%s5 + $0x3c] sm:$0xff]
    %v722 = vld [vmem:[%s5 + $0x44] sm:$0xf]
    %v723 = vld [vmem:[%s5 + $0x48] sm:$0xff]
    %v724 = vld [vmem:[%s5 + $0x50] sm:$0xf]
    %v725 = vld [vmem:[%s5 + $0x54] sm:$0xff]
    %v726 = vld [vmem:[%s5 + $0x5c] sm:$0xf]
    %v743 = vunpack.c.l.b16 %v711
    %v744 = vunpack.c.h.b16 %v711
    %v745 = vunpack.c.l.b16 %v712
    %v746 = vunpack.c.l.b16 %v713
    %v747 = vunpack.c.h.b16 %v713
    %v748 = vunpack.c.l.b16 %v714
    %v749 = vunpack.c.l.b16 %v715
    %v750 = vunpack.c.h.b16 %v715
    %v751 = vunpack.c.l.b16 %v716
    %v752 = vunpack.c.l.b16 %v717
    %v753 = vunpack.c.h.b16 %v717
    %v754 = vunpack.c.l.b16 %v718
    %v755 = vunpack.c.l.b16 %v719
    %v756 = vunpack.c.h.b16 %v719
    %v757 = vunpack.c.l.b16 %v720
    %v758 = vunpack.c.l.b16 %v721
    %v759 = vunpack.c.h.b16 %v721
    %v760 = vunpack.c.l.b16 %v722
    %v761 = vunpack.c.l.b16 %v723
    %v762 = vunpack.c.h.b16 %v723
    %v763 = vunpack.c.l.b16 %v724
    %v764 = vunpack.c.l.b16 %v725
    %v765 = vunpack.c.h.b16 %v725
    %v766 = vunpack.c.l.b16 %v726
    %v767 = vpack.c.b16 %v746, %v743
    %v768 = vpack.c.b16 %v747, %v744
    %v769 = vpack.c.b16 %v748, %v745
    %v770 = vpack.c.b16 %v752, %v749
    %v771 = vpack.c.b16 %v753, %v750
    %v772 = vpack.c.b16 %v754, %v751
    %v773 = vpack.c.b16 %v758, %v755
    %v774 = vpack.c.b16 %v759, %v756
    %v775 = vpack.c.b16 %v760, %v757
    %v776 = vpack.c.b16 %v764, %v761
    %v777 = vpack.c.b16 %v765, %v762
    %v778 = vpack.c.b16 %v766, %v763
    %vm791 = vcmask 523264
    %v793 = vsel %vm791, %v707, 0
    %v796 = vsel %vm791, %v708, 0
    %v799 = vsel %vm791, %v709, 0
    %v802 = vsel %vm791, %v710, 0
    %804 = vmatprep.subr.bf16.mxu0 0
    %805 = vmatpush1.bf16.msra.mxu0 0
    %806 = vmatprep.subr.bf16.mxu0 0
    %807 = vmatpush1.bf16.msra.mxu0 0
    %808 = vmatprep.subr.bf16.mxu0 0
    %809 = vmatpush1.bf16.msra.mxu0 0
    %810 = vmatprep.subr.bf16.mxu0 0
    %811 = vmatpush1.bf16.msra.mxu0 0
    %812 = vmatprep.subr.bf16.mxu0 %v777
    %813 = vmatpush1.bf16.msra.mxu0 %v776
    %814 = vmatprep.subr.bf16.mxu0 %v774
    %815 = vmatpush1.bf16.msra.mxu0 %v773
    %816 = vmatprep.subr.bf16.mxu0 %v771
    %817 = vmatpush1.bf16.msra.mxu0 %v770
    %818 = vmatprep.subr.bf16.mxu0 %v768
    %819 = vmatpush1.bf16.msra.mxu0 %v767
    %820 = vmatprep.subr.bf16.mxu0 0
    %821 = vmatpush2.bf16.msra.mxu0 0
    %822 = vmatprep.subr.bf16.mxu0 0
    %823 = vmatpush2.bf16.msra.mxu0 0
    %824 = vmatprep.subr.bf16.mxu0 0
    %825 = vmatpush2.bf16.msra.mxu0 0
    %826 = vmatprep.subr.bf16.mxu0 0
    %827 = vmatpush2.bf16.msra.mxu0 0
    %828 = vmatprep.subr.bf16.mxu0 0
    %829 = vmatpush2.bf16.msra.mxu0 0
    %830 = vmatprep.subr.bf16.mxu0 0
    %831 = vmatpush2.bf16.msra.mxu0 0
    %832 = vmatprep.subr.bf16.mxu0 0
    %833 = vmatpush2.bf16.msra.mxu0 0
    %834 = vmatprep.subr.bf16.mxu0 0
    %835 = vmatpush2.bf16.msra.mxu0 0
    %836 = vmatprep.mubr.bf16.mxu0 0
    %837 = vmatmul.mubr.bf16.gmra.mxu0 %v793
    %v838 = vpop.f32.mrf.mxu0
    %v839 = vadd.f32 0.0, %v838
    %v840 = vpop.f32.mrf.mxu0
    %v841 = vadd.f32 0.0, %v840
    %v842 = vpop.f32.mrf.mxu0
    %v843 = vadd.f32 0.0, %v842
    %v844 = vpop.f32.mrf.mxu0
    %v845 = vadd.f32 0.0, %v844
    %846 = vmatprep.mubr.bf16.mxu0 0
    %847 = vmatmul.mubr.bf16.gmra.mxu0 %v796
    %v848 = vpop.f32.mrf.mxu0
    %v849 = vadd.f32 0.0, %v848
    %v850 = vpop.f32.mrf.mxu0
    %v851 = vadd.f32 0.0, %v850
    %v852 = vpop.f32.mrf.mxu0
    %v853 = vadd.f32 0.0, %v852
    %v854 = vpop.f32.mrf.mxu0
    %v855 = vadd.f32 0.0, %v854
    %856 = vmatprep.mubr.bf16.mxu0 0
    %857 = vmatmul.mubr.bf16.gmra.mxu0 %v799
    %v858 = vpop.f32.mrf.mxu0
    %v859 = vadd.f32 0.0, %v858
    %v860 = vpop.f32.mrf.mxu0
    %v861 = vadd.f32 0.0, %v860
    %v862 = vpop.f32.mrf.mxu0
    %v863 = vadd.f32 0.0, %v862
    %v864 = vpop.f32.mrf.mxu0
    %v865 = vadd.f32 0.0, %v864
    %866 = vmatprep.mubr.bf16.mxu0 0
    %867 = vmatmul.mubr.bf16.gmra.mxu0 %v802
    %v868 = vpop.f32.mrf.mxu0
    %v869 = vadd.f32 0.0, %v868
    %v870 = vpop.f32.mrf.mxu0
    %v871 = vadd.f32 0.0, %v870
    %v872 = vpop.f32.mrf.mxu0
    %v873 = vadd.f32 0.0, %v872
    %v874 = vpop.f32.mrf.mxu0
    %v875 = vadd.f32 0.0, %v874
    %876 = vdwg.mxu0
    %877 = vmatprep.subr.bf16.mxu0 0
    %878 = vmatpush1.bf16.msra.mxu0 0
    %879 = vmatprep.subr.bf16.mxu0 0
    %880 = vmatpush1.bf16.msra.mxu0 0
    %881 = vmatprep.subr.bf16.mxu0 0
    %882 = vmatpush1.bf16.msra.mxu0 0
    %883 = vmatprep.subr.bf16.mxu0 0
    %884 = vmatpush1.bf16.msra.mxu0 0
    %885 = vmatprep.subr.bf16.mxu0 0
    %886 = vmatpush1.bf16.msra.mxu0 %v778
    %887 = vmatprep.subr.bf16.mxu0 0
    %888 = vmatpush1.bf16.msra.mxu0 %v775
    %889 = vmatprep.subr.bf16.mxu0 0
    %890 = vmatpush1.bf16.msra.mxu0 %v772
    %891 = vmatprep.subr.bf16.mxu0 0
    %892 = vmatpush1.bf16.msra.mxu0 %v769
    %893 = vmatprep.subr.bf16.mxu0 0
    %894 = vmatpush2.bf16.msra.mxu0 0
    %895 = vmatprep.subr.bf16.mxu0 0
    %896 = vmatpush2.bf16.msra.mxu0 0
    %897 = vmatprep.subr.bf16.mxu0 0
    %898 = vmatpush2.bf16.msra.mxu0 0
    %899 = vmatprep.subr.bf16.mxu0 0
    %900 = vmatpush2.bf16.msra.mxu0 0
    %901 = vmatprep.subr.bf16.mxu0 0
    %902 = vmatpush2.bf16.msra.mxu0 0
    %903 = vmatprep.subr.bf16.mxu0 0
    %904 = vmatpush2.bf16.msra.mxu0 0
    %905 = vmatprep.subr.bf16.mxu0 0
    %906 = vmatpush2.bf16.msra.mxu0 0
    %907 = vmatprep.subr.bf16.mxu0 0
    %908 = vmatpush2.bf16.msra.mxu0 0
    %909 = vmatprep.mubr.bf16.mxu0 0
    %910 = vmatmul.mubr.bf16.gmra.mxu0 %v793
    %v911 = vpop.f32.mrf.mxu0
    %v912 = vadd.f32 0.0, %v911
    %v913 = vpop.f32.mrf.mxu0
    %v914 = vpop.f32.mrf.mxu0
    %v915 = vadd.f32 0.0, %v914
    %v916 = vpop.f32.mrf.mxu0
    %917 = vmatprep.mubr.bf16.mxu0 0
    %918 = vmatmul.mubr.bf16.gmra.mxu0 %v796
    %v919 = vpop.f32.mrf.mxu0
    %v920 = vadd.f32 0.0, %v919
    %v921 = vpop.f32.mrf.mxu0
    %v922 = vpop.f32.mrf.mxu0
    %v923 = vadd.f32 0.0, %v922
    %v924 = vpop.f32.mrf.mxu0
    %925 = vmatprep.mubr.bf16.mxu0 0
    %926 = vmatmul.mubr.bf16.gmra.mxu0 %v799
    %v927 = vpop.f32.mrf.mxu0
    %v928 = vadd.f32 0.0, %v927
    %v929 = vpop.f32.mrf.mxu0
    %v930 = vpop.f32.mrf.mxu0
    %v931 = vadd.f32 0.0, %v930
    %v932 = vpop.f32.mrf.mxu0
    %933 = vmatprep.mubr.bf16.mxu0 0
    %934 = vmatmul.mubr.bf16.gmra.mxu0 %v802
    %v935 = vpop.f32.mrf.mxu0
    %v936 = vadd.f32 0.0, %v935
    %v937 = vpop.f32.mrf.mxu0
    %v938 = vpop.f32.mrf.mxu0
    %v939 = vadd.f32 0.0, %v938
    %v940 = vpop.f32.mrf.mxu0
    %941 = vdwg.mxu0
    %v942 = vrot.slane %v839, 7
    %v943 = vrot.slane %v843, 7
    %v944 = vrot.slane %v849, 7
    %v945 = vrot.slane %v853, 7
    %v946 = vrot.slane %v859, 7
    %v947 = vrot.slane %v863, 7
    %v948 = vrot.slane %v869, 7
    %v949 = vrot.slane %v873, 7
    %v950 = vsel %vm316, %v948, %v949
    %v951 = vsel %vm316, %v947, %v948
    %v952 = vsel %vm316, %v946, %v947
    %v953 = vsel %vm316, %v945, %v946
    %v954 = vsel %vm316, %v944, %v945
    %v955 = vsel %vm316, %v943, %v944
    %v956 = vsel %vm316, %v942, %v943
    %v957 = vsel %vm316, %v949, %v942
    %v958 = vsel %vm133, %v957, 0.0
    %v959 = vsel %vm134, %v956, 0.0
    %v960 = vsel %vm135, %v955, 0.0
    %v961 = vsel %vm136, %v954, 0.0
    %v962 = vsel %vm137, %v953, 0.0
    %v963 = vsel %vm138, %v952, 0.0
    %v964 = vsel %vm139, %v951, 0.0
    %v965 = vsel %vm140, %v950, 0.0
    %v966 = vrot.slane %v912, 1
    %v967 = vrot.slane %v915, 1
    %v968 = vrot.slane %v920, 1
    %v969 = vrot.slane %v923, 1
    %v970 = vrot.slane %v928, 1
    %v971 = vrot.slane %v931, 1
    %v972 = vrot.slane %v936, 1
    %v973 = vrot.slane %v939, 1
    %v974 = vsel %vm341, %v972, %v973
    %v975 = vsel %vm341, %v971, %v972
    %v976 = vsel %vm341, %v970, %v971
    %v977 = vsel %vm341, %v969, %v970
    %v978 = vsel %vm341, %v968, %v969
    %v979 = vsel %vm341, %v967, %v968
    %v980 = vsel %vm341, %v966, %v967
    %v981 = vsel %vm341, %v973, %v966
    %v982 = vsel %vm141, %v980, 0.0
    %v983 = vsel %vm142, %v979, 0.0
    %v984 = vsel %vm143, %v978, 0.0
    %v985 = vsel %vm144, %v977, 0.0
    %v986 = vsel %vm145, %v976, 0.0
    %v987 = vsel %vm146, %v975, 0.0
    %v988 = vsel %vm147, %v974, 0.0
    %v989 = vsel %vm148, %v981, 0.0
    %v990 = vadd.f32 %v958, %v841
    %v991 = vadd.f32 %v959, %v845
    %v992 = vadd.f32 %v960, %v851
    %v993 = vadd.f32 %v961, %v855
    %v994 = vadd.f32 %v962, %v861
    %v995 = vadd.f32 %v963, %v865
    %v996 = vadd.f32 %v964, %v871
    %v997 = vadd.f32 %v965, %v875
    %v998 = vadd.f32 %v990, %v982
    %v999 = vadd.f32 %v991, %v983
    %v1000 = vadd.f32 %v992, %v984
    %v1001 = vadd.f32 %v993, %v985
    %v1002 = vadd.f32 %v994, %v986
    %v1003 = vadd.f32 %v995, %v987
    %v1004 = vadd.f32 %v996, %v988
    %v1005 = vadd.f32 %v997, %v989
    %v1006 = vld [vmem:[%s6] sm:$0x1]
    %v1008 = vlaneseq
    %v1009 = vshrl.u32 %v1008, 7
    %v1010 = vsub.s32 0, %v1009
    %v1011 = vrot.slane %v1006, %v1010
    %v1013 = vadd.f32 %v998, %v1011
    %v1014 = vadd.f32 %v999, %v1011
    %v1015 = vadd.f32 %v1000, %v1011
    %v1016 = vadd.f32 %v1001, %v1011
    %v1017 = vadd.f32 %v1002, %v1011
    %v1018 = vadd.f32 %v1003, %v1011
    %v1019 = vadd.f32 %v1004, %v1011
    %v1020 = vadd.f32 %v1005, %v1011
    %v1021 = vmax.f32 %v1013, 0.0
    %v1022 = vmax.f32 %v1014, 0.0
    %v1023 = vmax.f32 %v1015, 0.0
    %v1024 = vmax.f32 %v1016, 0.0
    %v1025 = vmax.f32 %v1017, 0.0
    %v1026 = vmax.f32 %v1018, 0.0
    %v1027 = vmax.f32 %v1019, 0.0
    %v1028 = vmax.f32 %v1020, 0.0
    %v1029 = vrot.slane %v1021, 4
    %v1030 = vmax.f32 %v1021, %v1029
    %v1031 = vrot.slane %v1030, 2
    %v1032 = vmax.f32 %v1030, %v1031
    %v1033 = vrot.slane %v1032, 1
    %v1034 = vmax.f32 %v1032, %v1033
    %v1035 = vrot.slane %v1022, 4
    %v1036 = vmax.f32 %v1022, %v1035
    %v1037 = vrot.slane %v1036, 2
    %v1038 = vmax.f32 %v1036, %v1037
    %v1039 = vrot.slane %v1038, 1
    %v1040 = vmax.f32 %v1038, %v1039
    %v1041 = vrot.slane %v1023, 4
    %v1042 = vmax.f32 %v1023, %v1041
    %v1043 = vrot.slane %v1042, 2
    %v1044 = vmax.f32 %v1042, %v1043
    %v1045 = vrot.slane %v1044, 1
    %v1046 = vmax.f32 %v1044, %v1045
    %v1047 = vrot.slane %v1024, 4
    %v1048 = vmax.f32 %v1024, %v1047
    %v1049 = vrot.slane %v1048, 2
    %v1050 = vmax.f32 %v1048, %v1049
    %v1051 = vrot.slane %v1050, 1
    %v1052 = vmax.f32 %v1050, %v1051
    %v1053 = vrot.slane %v1025, 4
    %v1054 = vmax.f32 %v1025, %v1053
    %v1055 = vrot.slane %v1054, 2
    %v1056 = vmax.f32 %v1054, %v1055
    %v1057 = vrot.slane %v1056, 1
    %v1058 = vmax.f32 %v1056, %v1057
    %v1059 = vrot.slane %v1026, 4
    %v1060 = vmax.f32 %v1026, %v1059
    %v1061 = vrot.slane %v1060, 2
    %v1062 = vmax.f32 %v1060, %v1061
    %v1063 = vrot.slane %v1062, 1
    %v1064 = vmax.f32 %v1062, %v1063
    %v1065 = vrot.slane %v1027, 4
    %v1066 = vmax.f32 %v1027, %v1065
    %v1067 = vrot.slane %v1066, 2
    %v1068 = vmax.f32 %v1066, %v1067
    %v1069 = vrot.slane %v1068, 1
    %v1070 = vmax.f32 %v1068, %v1069
    %v1071 = vrot.slane %v1028, 4
    %v1072 = vmax.f32 %v1028, %v1071
    %v1073 = vrot.slane %v1072, 2
    %v1074 = vmax.f32 %v1072, %v1073
    %v1075 = vrot.slane %v1074, 1
    %v1076 = vmax.f32 %v1074, %v1075
    %vm1085 = vcmask 1041409
    %v1086 = vsel %vm1085, %v1040, %v1034
    %vm1087 = vcmask 1042434
    %v1088 = vsel %vm1087, %v1046, %v1086
    %vm1089 = vcmask 1043459
    %v1090 = vsel %vm1089, %v1052, %v1088
    %vm1091 = vcmask 1044484
    %v1092 = vsel %vm1091, %v1058, %v1090
    %vm1093 = vcmask 1045509
    %v1094 = vsel %vm1093, %v1064, %v1092
    %vm1095 = vcmask 1046534
    %v1096 = vsel %vm1095, %v1070, %v1094
    %vm1097 = vcmask 1047559
    %v1098 = vsel %vm1097, %v1076, %v1096
    %1100 = vst [vmem:[#allocation2] sm:$0xff] %v1098
    // Predicated region
    $region30: #{tpu_custom_call.1} parent=1 // pred_check
      _
    $region31: #{tpu_custom_call.1} parent=1 // pred_check_branch
      %1102 = sbr.rel (0) target = $region33
    $region32: #{tpu_custom_call.1} parent=1 // pred_region
      %s1104 = ssub.s32 128, 128
      %1105 = vsyncadd [#allocation3], %s1104
      %s1107 = sshll.u32 [#allocation2], 4
      %s1108 = int_to_ptr.vmem [resolvable:$true] %s1107
      %1110 = dma.vmem_to_hbm [thread:$0]  %s1108, 128, %s7, [#allocation3]
    $region33: #{tpu_custom_call.1} parent=1 // pred_fallthru
      _
    // Predicated region
    $region34: #{tpu_custom_call.1} parent=1 // pred_check
      _
    $region35: #{tpu_custom_call.1} parent=1 // pred_check_branch
      %1112 = sbr.rel (0) target = $region37
    $region36: #{tpu_custom_call.1} parent=1 // pred_region
      %1113 = dma.done [#allocation3], 128
    $region37: #{tpu_custom_call.1} parent=1 // pred_fallthru
      _
    %1114 = vsyncpa [#allocation3], 1

</llo_original>
